<compile_context>
chip_gen: v5e
topology: v5e:2x2
jax: 0.10.0
libtpu: 0.0.40
codegen_flags: <defaults>
</compile_context>

<pallas_src>
import jax
import jax.numpy as jnp
from jax.experimental import pallas as pl
from jax.experimental.pallas import tpu as pltpu

D_IN, D_MID, D_OUT = 512, 256, 512
DEFAULT_BLOCK_B = 1024  # batch tile; multiple of 8, amortizes per-step overhead


def _m_forward_kernel(x_ref, w1_ref, w2_ref, w3_ref, o_ref):
    # x_ref:  (TB, 512) f32
    # w1_ref: (512, 256) bf16  == linear1.weight.T     (VMEM-resident across grid steps)
    # w2_ref: (256, 256) bf16  == sub.linear.weight.T
    # w3_ref: (256, 512) bf16  == linear2.weight.T
    # o_ref:  (TB, 512) f32
    x = x_ref[...].astype(jnp.bfloat16)
    h1 = jnp.dot(x, w1_ref[...], preferred_element_type=jnp.float32)
    h2 = jnp.dot(h1.astype(jnp.bfloat16), w2_ref[...],
                 preferred_element_type=jnp.float32)
    out = jnp.dot(h2.astype(jnp.bfloat16), w3_ref[...],
                  preferred_element_type=jnp.float32)
    o_ref[...] = out.astype(o_ref.dtype)


def prepare_m_params(w1, w2, w3, *, compute_dtype=jnp.bfloat16):
    """One-time weight preprocessing (hoisted out of the per-call path).

    w1: (256, 512), w2: (256, 256), w3: (512, 256) -- torch nn.Linear layout (out, in).
    Returns (in, out)-layout matrices cast to the MXU compute dtype so the kernel is a
    straight chain of MXU matmuls.
    """
    return (jnp.asarray(w1).T.astype(compute_dtype),
            jnp.asarray(w2).T.astype(compute_dtype),
            jnp.asarray(w3).T.astype(compute_dtype))


def _pick_batch_tile(batch, block_b):
    """Batch tile: full extent for tiny batches, else >=2 grid steps (v7x 2-TC sharding)."""
    if batch <= 8:
        return batch  # single full-extent block; zero padding, one grid step
    half = -(-batch // 2)             # ceil(B / 2)
    half = ((half + 7) // 8) * 8      # round up to sublane multiple
    return min(block_b, half)


def m_forward(x, w1t, w2t, w3t, *, block_b=DEFAULT_BLOCK_B):
    """x: (B, 512) f32; w*t: pre-transposed/cast weights from prepare_m_params."""
    B = x.shape[0]
    tb = _pick_batch_tile(B, block_b)
    grid = (pl.cdiv(B, tb),)

    flops = 2 * B * (D_IN * D_MID + D_MID * D_MID + D_MID * D_OUT)
    bytes_accessed = (
        x.size * x.dtype.itemsize
        + B * D_OUT * x.dtype.itemsize
        + w1t.size * w1t.dtype.itemsize
        + w2t.size * w2t.dtype.itemsize
        + w3t.size * w3t.dtype.itemsize
    )

    return pl.pallas_call(
        _m_forward_kernel,
        out_shape=jax.ShapeDtypeStruct((B, D_OUT), x.dtype),
        grid=grid,
        in_specs=[
            pl.BlockSpec((tb, D_IN), lambda i: (i, 0)),      # x: tiled over batch
            pl.BlockSpec((D_IN, D_MID), lambda i: (0, 0)),   # weights: grid-invariant
            pl.BlockSpec((D_MID, D_MID), lambda i: (0, 0)),
            pl.BlockSpec((D_MID, D_OUT), lambda i: (0, 0)),
        ],
        out_specs=pl.BlockSpec((tb, D_OUT), lambda i: (i, 0)),
        compiler_params=pltpu.CompilerParams(
            # Batch tiles are independent -> shard across TensorCores on v7x.
            dimension_semantics=("parallel",),
        ),
        cost_estimate=pl.CostEstimate(
            flops=flops, transcendentals=0, bytes_accessed=bytes_accessed),
    )(x, w1t, w2t, w3t)


if __name__ == "__main__":
    key = jax.random.PRNGKey(0)
    kx, k1, k2, k3 = jax.random.split(key, 4)

    # torch Linear weight layout (out, in), uniform(-1/sqrt(in), 1/sqrt(in)) default init.
    def linear_w(k, out_f, in_f):
        bound = 1.0 / jnp.sqrt(jnp.float32(in_f))
        return jax.random.uniform(k, (out_f, in_f), jnp.float32, -bound, bound)

    w1 = linear_w(k1, 256, 512)  # linear1
    w2 = linear_w(k2, 256, 256)  # sub.linear
    w3 = linear_w(k3, 512, 256)  # linear2

    # Hoisted, one-time weight preprocessing (transpose + bf16 cast).
    w1t, w2t, w3t = prepare_m_params(w1, w2, w3)
    w1t, w2t, w3t = jax.block_until_ready((w1t, w2t, w3t))

    # Reference in plain JAX f32 (torch semantics: y = x @ W.T at each layer).
    def ref_f32(xv):
        return ((xv @ w1.T) @ w2.T) @ w3.T

    # B=4: small-batch single-block path.  B=40: tiled path with a ragged trailing block.
    for B in (4, 40):
        xv = jax.random.normal(jax.random.fold_in(kx, B), (B, D_IN), dtype=jnp.float32)
        out = jax.block_until_ready(m_forward(xv, w1t, w2t, w3t))
        ref = ref_f32(xv)
        assert out.shape == (B, D_OUT)
        # bf16 MXU operands -> loosened tolerance vs. the f32 reference.
        assert jnp.allclose(out, ref, atol=5e-2, rtol=5e-2)

    print("KERNEL_OK")
</pallas_src>

<mosaic_0001>
module attributes {stable_mosaic.version = 11 : i64} {
  func.func @_m_forward_kernel(%arg0: i32, %arg1: memref<4x512xf32, #tpu.memory_space<vmem>>, %arg2: memref<512x256xbf16, #tpu.memory_space<vmem>>, %arg3: memref<256x256xbf16, #tpu.memory_space<vmem>>, %arg4: memref<256x512xbf16, #tpu.memory_space<vmem>>, %arg5: memref<4x512xf32, #tpu.memory_space<vmem>>) attributes {dimension_semantics = [#tpu.dimension_semantics<parallel>], iteration_bounds = array<i64: 1>, scalar_prefetch = 0 : i64, scratch_operands = 0 : i64, tpu.core_type = #tpu.core_type<tc>, window_params = [{transform_indices = @transform_0, window_bounds = array<i64: 4, 512>}, {pipeline_mode = #tpu.pipeline_mode<synchronous>, transform_indices = @transform_1, window_bounds = array<i64: 512, 256>}, {pipeline_mode = #tpu.pipeline_mode<synchronous>, transform_indices = @transform_2, window_bounds = array<i64: 256, 256>}, {pipeline_mode = #tpu.pipeline_mode<synchronous>, transform_indices = @transform_3, window_bounds = array<i64: 256, 512>}, {transform_indices = @transform_4, window_bounds = array<i64: 4, 512>}]} {
    %c0 = arith.constant 0 : index
    %c0_0 = arith.constant 0 : index
    %0 = vector.load %arg1[%c0, %c0_0] : memref<4x512xf32, #tpu.memory_space<vmem>>, vector<4x512xf32>
    %1 = arith.truncf %0 : vector<4x512xf32> to vector<4x512xbf16>
    %c0_1 = arith.constant 0 : index
    %c0_2 = arith.constant 0 : index
    %2 = vector.load %arg2[%c0_1, %c0_2] : memref<512x256xbf16, #tpu.memory_space<vmem>>, vector<512x256xbf16>
    %cst = arith.constant dense<0.000000e+00> : vector<4x256xf32>
    %3 = tpu.matmul %1, %2, %cst {dimension_numbers = #tpu.dot_dimension_numbers<[1], [0], [0], [1], [0, 0, 1, 1], [], []>} : vector<4x512xbf16>, vector<512x256xbf16>, vector<4x256xf32> -> vector<4x256xf32>
    %4 = arith.truncf %3 : vector<4x256xf32> to vector<4x256xbf16>
    %c0_3 = arith.constant 0 : index
    %c0_4 = arith.constant 0 : index
    %5 = vector.load %arg3[%c0_3, %c0_4] : memref<256x256xbf16, #tpu.memory_space<vmem>>, vector<256x256xbf16>
    %cst_5 = arith.constant dense<0.000000e+00> : vector<4x256xf32>
    %6 = tpu.matmul %4, %5, %cst_5 {dimension_numbers = #tpu.dot_dimension_numbers<[1], [0], [0], [1], [0, 0, 1, 1], [], []>} : vector<4x256xbf16>, vector<256x256xbf16>, vector<4x256xf32> -> vector<4x256xf32>
    %7 = arith.truncf %6 : vector<4x256xf32> to vector<4x256xbf16>
    %c0_6 = arith.constant 0 : index
    %c0_7 = arith.constant 0 : index
    %8 = vector.load %arg4[%c0_6, %c0_7] : memref<256x512xbf16, #tpu.memory_space<vmem>>, vector<256x512xbf16>
    %cst_8 = arith.constant dense<0.000000e+00> : vector<4x512xf32>
    %9 = tpu.matmul %7, %8, %cst_8 {dimension_numbers = #tpu.dot_dimension_numbers<[1], [0], [0], [1], [0, 0, 1, 1], [], []>} : vector<4x256xbf16>, vector<256x512xbf16>, vector<4x512xf32> -> vector<4x512xf32>
    %c0_9 = arith.constant 0 : index
    %c0_10 = arith.constant 0 : index
    %10 = vector.load %arg5[%c0_9, %c0_10] : memref<4x512xf32, #tpu.memory_space<vmem>>, vector<4x512xf32>
    tpu.vector_store %arg5[%c0_9, %c0_10], %9 {strides = array<i32>} : memref<4x512xf32, #tpu.memory_space<vmem>>, vector<4x512xf32>,
    return
  }
  func.func @transform_0(%arg0: i32) -> (i32, i32) {
    %c0_i32 = arith.constant 0 : i32
    %c0_i32_0 = arith.constant 0 : i32
    return %arg0, %c0_i32 : i32, i32
  }
  func.func @transform_1(%arg0: i32) -> (i32, i32) {
    %c0_i32 = arith.constant 0 : i32
    %c0_i32_0 = arith.constant 0 : i32
    %c0_i32_1 = arith.constant 0 : i32
    return %c0_i32, %c0_i32_0 : i32, i32
  }
  func.func @transform_2(%arg0: i32) -> (i32, i32) {
    %c0_i32 = arith.constant 0 : i32
    %c0_i32_0 = arith.constant 0 : i32
    %c0_i32_1 = arith.constant 0 : i32
    return %c0_i32, %c0_i32_0 : i32, i32
  }
  func.func @transform_3(%arg0: i32) -> (i32, i32) {
    %c0_i32 = arith.constant 0 : i32
    %c0_i32_0 = arith.constant 0 : i32
    %c0_i32_1 = arith.constant 0 : i32
    return %c0_i32, %c0_i32_0 : i32, i32
  }
  func.func @transform_4(%arg0: i32) -> (i32, i32) {
    %c0_i32 = arith.constant 0 : i32
    %c0_i32_0 = arith.constant 0 : i32
    return %arg0, %c0_i32 : i32, i32
  }
}

</mosaic_0001>

<llo_original>
// kernel: tpu_custom_call.1
$region0: #{tpu_custom_call.1}
  #allocation0 [shape = 'u32[]', space=smem, size = 0x4, offset = 0x4, fixed_abs, tag = 'smem constant byte address 0x4 - core index']
  #allocation1 [shape = 'u32[72,128]{1,0:T(1,128)}', space=vmem, size = 0x9000, scoped, tag = 'internal scratch']
  %s0 = inlined_call_operand.hbm [shape: f32[4,512], index: 0, kind: input, shape index: {}]
  %s1 = inlined_call_operand.hbm [shape: bf16[512,256], index: 1, kind: input, shape index: {}]
  %s2 = inlined_call_operand.hbm [shape: bf16[256,256], index: 2, kind: input, shape index: {}]
  %s3 = inlined_call_operand.hbm [shape: bf16[256,512], index: 3, kind: input, shape index: {}]
  %s4 = inlined_call_operand.hbm [shape: f32[4,512], index: 4, kind: output, shape index: {}]
  %s5 = sld [smem:[#allocation0]]
  $region42: #{tpu_custom_call.1} parent=0
    _
  %s7 = ssub.s32 1, %s5
  %s8 = scalar_select 0, %s7, %s5
  $region1: #{tpu_custom_call.1} parent=0
    #allocation2 [shape = 'u8[8192]{0}', space=vmem, size = 0x2000, scoped, tag = 'input window, operand 0, single buffered']
    #allocation3 [shape = 's32[1]{0}', space=sflag, size = 0x4, scoped, tag = 'scoped memory for tpu_custom_call.1']
    #allocation4 [shape = 's32[1]{0}', space=sflag, size = 0x4, scoped, tag = 'scoped memory for tpu_custom_call.1']
    #allocation5 [shape = 'u8[262144]{0}', space=vmem, size = 0x40000, scoped, tag = 'input window, operand 1, single buffered']
    #allocation6 [shape = 's32[1]{0}', space=sflag, size = 0x4, scoped, tag = 'scoped memory for tpu_custom_call.1']
    #allocation7 [shape = 'u8[131072]{0}', space=vmem, size = 0x20000, scoped, tag = 'input window, operand 2, single buffered']
    #allocation8 [shape = 'u8[262144]{0}', space=vmem, size = 0x40000, scoped, tag = 'input window, operand 3, single buffered']
    #allocation9 [shape = 's32[1]{0}', space=sflag, size = 0x4, scoped, tag = 'scoped memory for tpu_custom_call.1']
    #allocation10 [shape = 'u8[8192]{0}', space=vmem, size = 0x2000, scoped, tag = 'output window, operand 0, single buffered']
    %9 = vsyncpa [#allocation3], 0
    %10 = vsyncpa [#allocation6], 0
    %11 = vsyncpa [#allocation9], 0
    %12 = vsyncpa [#allocation4], 0
    // Predicated region
    $region2: #{tpu_custom_call.1} parent=1 // pred_check
      _
    $region3: #{tpu_custom_call.1} parent=1 // pred_check_branch
      %14 = sbr.rel (0) target = $region5
    $region4: #{tpu_custom_call.1} parent=1 // pred_region
      %16 = vsyncadd [#allocation3], 0
      %s18 = sshll.u32 %s0, 4
      %s19 = int_to_ptr.hbm [resolvable:$true] %s18
      %s20 = sshll.u32 [#allocation2], 4
      %s21 = int_to_ptr.vmem [resolvable:$true] %s20
      %23 = dma.hbm_to_vmem [thread:$0]  %s19, 256, %s21, [#allocation3]
    $region5: #{tpu_custom_call.1} parent=1 // pred_fallthru
      _
    // Predicated region
    $region6: #{tpu_custom_call.1} parent=1 // pred_check
      _
    $region7: #{tpu_custom_call.1} parent=1 // pred_check_branch
      %25 = sbr.rel (0) target = $region9
    $region8: #{tpu_custom_call.1} parent=1 // pred_region
      %27 = vsyncadd [#allocation6], 0
      %s28 = sshll.u32 %s1, 4
      %s29 = int_to_ptr.hbm [resolvable:$true] %s28
      %s30 = sshll.u32 [#allocation5], 4
      %s31 = int_to_ptr.vmem [resolvable:$true] %s30
      %36 = dma.hbm_to_vmem [thread:$0]  %s29, 8192, %s31, [#allocation6], 128, 128, 8
    $region9: #{tpu_custom_call.1} parent=1 // pred_fallthru
      _
    // Predicated region
    $region10: #{tpu_custom_call.1} parent=1 // pred_check
      _
    $region11: #{tpu_custom_call.1} parent=1 // pred_check_branch
      %38 = sbr.rel (0) target = $region13
    $region12: #{tpu_custom_call.1} parent=1 // pred_region
      %40 = vsyncadd [#allocation6], 0
      %s41 = sshll.u32 %s2, 4
      %s42 = int_to_ptr.hbm [resolvable:$true] %s41
      %s43 = sshll.u32 [#allocation7], 4
      %s44 = int_to_ptr.vmem [resolvable:$true] %s43
      %49 = dma.hbm_to_vmem [thread:$0]  %s42, 4096, %s44, [#allocation6], 128, 128, 8
    $region13: #{tpu_custom_call.1} parent=1 // pred_fallthru
      _
    // Predicated region
    $region14: #{tpu_custom_call.1} parent=1 // pred_check
      _
    $region15: #{tpu_custom_call.1} parent=1 // pred_check_branch
      %51 = sbr.rel (0) target = $region17
    $region16: #{tpu_custom_call.1} parent=1 // pred_region
      %53 = vsyncadd [#allocation9], 0
      %s54 = sshll.u32 %s3, 4
      %s55 = int_to_ptr.hbm [resolvable:$true] %s54
      %s56 = sshll.u32 [#allocation8], 4
      %s57 = int_to_ptr.vmem [resolvable:$true] %s56
      %62 = dma.hbm_to_vmem [thread:$0]  %s55, 8192, %s57, [#allocation9], 256, 256, 16
    $region17: #{tpu_custom_call.1} parent=1 // pred_fallthru
      _
    // Predicated region
    $region18: #{tpu_custom_call.1} parent=1 // pred_check
      _
    $region19: #{tpu_custom_call.1} parent=1 // pred_check_branch
      %64 = sbr.rel (0) target = $region21
    $region20: #{tpu_custom_call.1} parent=1 // pred_region
      %66 = dma.done [#allocation3], 256
    $region21: #{tpu_custom_call.1} parent=1 // pred_fallthru
      _
    // Predicated region
    $region22: #{tpu_custom_call.1} parent=1 // pred_check
      _
    $region23: #{tpu_custom_call.1} parent=1 // pred_check_branch
      %68 = sbr.rel (0) target = $region25
    $region24: #{tpu_custom_call.1} parent=1 // pred_region
      %70 = dma.done [#allocation6], 8192
    $region25: #{tpu_custom_call.1} parent=1 // pred_fallthru
      _
    // Predicated region
    $region26: #{tpu_custom_call.1} parent=1 // pred_check
      _
    $region27: #{tpu_custom_call.1} parent=1 // pred_check_branch
      %72 = sbr.rel (0) target = $region29
    $region28: #{tpu_custom_call.1} parent=1 // pred_region
      %74 = dma.done [#allocation6], 4096
    $region29: #{tpu_custom_call.1} parent=1 // pred_fallthru
      _
    // Predicated region
    $region30: #{tpu_custom_call.1} parent=1 // pred_check
      _
    $region31: #{tpu_custom_call.1} parent=1 // pred_check_branch
      %76 = sbr.rel (0) target = $region33
    $region32: #{tpu_custom_call.1} parent=1 // pred_region
      %78 = dma.done [#allocation9], 8192
    $region33: #{tpu_custom_call.1} parent=1 // pred_fallthru
      _
    %v79 = vld [vmem:[#allocation2] sm:$0xff]
    %v80 = vld [vmem:[#allocation2 + $0x8] sm:$0xff]
    %83 = vst [vmem:[#allocation1] ss:$2 sm:$0xff] %v79
    %s84 = scalar_lea.vmem [#allocation1], 16
    %85 = vst [vmem:[%s84] ss:$2 sm:$0xff] %v80
    %v86 = vld.sshfl [vmem:[#allocation1] sm:$0xff pattern:$0x75316420]
    %v87 = vld.sshfl [vmem:[#allocation1 + $0x8] sm:$0xff pattern:$0x75316420]
    %v88 = vld.sshfl [vmem:[#allocation1 + $0x10] sm:$0xff pattern:$0x75316420]
    %v89 = vld.sshfl [vmem:[#allocation1 + $0x18] sm:$0xff pattern:$0x75316420]
    %v94 = vpack.c.bf16 %v86, %v86
    %v95 = vpack.c.bf16 %v87, %v87
    %v96 = vpack.c.bf16 %v88, %v88
    %v97 = vpack.c.bf16 %v89, %v89
    %v98 = vld [vmem:[#allocation5] sm:$0xff]
    %v99 = vld [vmem:[#allocation5 + $0x8] sm:$0xff]
    %v100 = vld [vmem:[#allocation5 + $0x10] sm:$0xff]
    %v101 = vld [vmem:[#allocation5 + $0x18] sm:$0xff]
    %v102 = vld [vmem:[#allocation5 + $0x20] sm:$0xff]
    %v103 = vld [vmem:[#allocation5 + $0x28] sm:$0xff]
    %v104 = vld [vmem:[#allocation5 + $0x30] sm:$0xff]
    %v105 = vld [vmem:[#allocation5 + $0x38] sm:$0xff]
    %v106 = vld [vmem:[#allocation5 + $0x40] sm:$0xff]
    %v107 = vld [vmem:[#allocation5 + $0x48] sm:$0xff]
    %v108 = vld [vmem:[#allocation5 + $0x50] sm:$0xff]
    %v109 = vld [vmem:[#allocation5 + $0x58] sm:$0xff]
    %v110 = vld [vmem:[#allocation5 + $0x60] sm:$0xff]
    %v111 = vld [vmem:[#allocation5 + $0x68] sm:$0xff]
    %v112 = vld [vmem:[#allocation5 + $0x70] sm:$0xff]
    %v113 = vld [vmem:[#allocation5 + $0x78] sm:$0xff]
    %v114 = vld [vmem:[#allocation5 + $0x80] sm:$0xff]
    %v115 = vld [vmem:[#allocation5 + $0x88] sm:$0xff]
    %v116 = vld [vmem:[#allocation5 + $0x90] sm:$0xff]
    %v117 = vld [vmem:[#allocation5 + $0x98] sm:$0xff]
    %v118 = vld [vmem:[#allocation5 + $0xa0] sm:$0xff]
    %v119 = vld [vmem:[#allocation5 + $0xa8] sm:$0xff]
    %v120 = vld [vmem:[#allocation5 + $0xb0] sm:$0xff]
    %v121 = vld [vmem:[#allocation5 + $0xb8] sm:$0xff]
    %v122 = vld [vmem:[#allocation5 + $0xc0] sm:$0xff]
    %v123 = vld [vmem:[#allocation5 + $0xc8] sm:$0xff]
    %v124 = vld [vmem:[#allocation5 + $0xd0] sm:$0xff]
    %v125 = vld [vmem:[#allocation5 + $0xd8] sm:$0xff]
    %v126 = vld [vmem:[#allocation5 + $0xe0] sm:$0xff]
    %v127 = vld [vmem:[#allocation5 + $0xe8] sm:$0xff]
    %v128 = vld [vmem:[#allocation5 + $0xf0] sm:$0xff]
    %v129 = vld [vmem:[#allocation5 + $0xf8] sm:$0xff]
    %v130 = vld [vmem:[#allocation5 + $0x100] sm:$0xff]
    %v131 = vld [vmem:[#allocation5 + $0x108] sm:$0xff]
    %v132 = vld [vmem:[#allocation5 + $0x110] sm:$0xff]
    %v133 = vld [vmem:[#allocation5 + $0x118] sm:$0xff]
    %v134 = vld [vmem:[#allocation5 + $0x120] sm:$0xff]
    %v135 = vld [vmem:[#allocation5 + $0x128] sm:$0xff]
    %v136 = vld [vmem:[#allocation5 + $0x130] sm:$0xff]
    %v137 = vld [vmem:[#allocation5 + $0x138] sm:$0xff]
    %v138 = vld [vmem:[#allocation5 + $0x140] sm:$0xff]
    %v139 = vld [vmem:[#allocation5 + $0x148] sm:$0xff]
    %v140 = vld [vmem:[#allocation5 + $0x150] sm:$0xff]
    %v141 = vld [vmem:[#allocation5 + $0x158] sm:$0xff]
    %v142 = vld [vmem:[#allocation5 + $0x160] sm:$0xff]
    %v143 = vld [vmem:[#allocation5 + $0x168] sm:$0xff]
    %v144 = vld [vmem:[#allocation5 + $0x170] sm:$0xff]
    %v145 = vld [vmem:[#allocation5 + $0x178] sm:$0xff]
    %v146 = vld [vmem:[#allocation5 + $0x180] sm:$0xff]
    %v147 = vld [vmem:[#allocation5 + $0x188] sm:$0xff]
    %v148 = vld [vmem:[#allocation5 + $0x190] sm:$0xff]
    %v149 = vld [vmem:[#allocation5 + $0x198] sm:$0xff]
    %v150 = vld [vmem:[#allocation5 + $0x1a0] sm:$0xff]
    %v151 = vld [vmem:[#allocation5 + $0x1a8] sm:$0xff]
    %v152 = vld [vmem:[#allocation5 + $0x1b0] sm:$0xff]
    %v153 = vld [vmem:[#allocation5 + $0x1b8] sm:$0xff]
    %v154 = vld [vmem:[#allocation5 + $0x1c0] sm:$0xff]
    %v155 = vld [vmem:[#allocation5 + $0x1c8] sm:$0xff]
    %v156 = vld [vmem:[#allocation5 + $0x1d0] sm:$0xff]
    %v157 = vld [vmem:[#allocation5 + $0x1d8] sm:$0xff]
    %v158 = vld [vmem:[#allocation5 + $0x1e0] sm:$0xff]
    %v159 = vld [vmem:[#allocation5 + $0x1e8] sm:$0xff]
    %v160 = vld [vmem:[#allocation5 + $0x1f0] sm:$0xff]
    %v161 = vld [vmem:[#allocation5 + $0x1f8] sm:$0xff]
    %v226 = vunpack.c.l.b16 %v98
    %v227 = vunpack.c.h.b16 %v98
    %v228 = vunpack.c.l.b16 %v99
    %v229 = vunpack.c.h.b16 %v99
    %v230 = vunpack.c.l.b16 %v100
    %v231 = vunpack.c.h.b16 %v100
    %v232 = vunpack.c.l.b16 %v101
    %v233 = vunpack.c.h.b16 %v101
    %v234 = vunpack.c.l.b16 %v102
    %v235 = vunpack.c.h.b16 %v102
    %v236 = vunpack.c.l.b16 %v103
    %v237 = vunpack.c.h.b16 %v103
    %v238 = vunpack.c.l.b16 %v104
    %v239 = vunpack.c.h.b16 %v104
    %v240 = vunpack.c.l.b16 %v105
    %v241 = vunpack.c.h.b16 %v105
    %v242 = vunpack.c.l.b16 %v106
    %v243 = vunpack.c.h.b16 %v106
    %v244 = vunpack.c.l.b16 %v107
    %v245 = vunpack.c.h.b16 %v107
    %v246 = vunpack.c.l.b16 %v108
    %v247 = vunpack.c.h.b16 %v108
    %v248 = vunpack.c.l.b16 %v109
    %v249 = vunpack.c.h.b16 %v109
    %v250 = vunpack.c.l.b16 %v110
    %v251 = vunpack.c.h.b16 %v110
    %v252 = vunpack.c.l.b16 %v111
    %v253 = vunpack.c.h.b16 %v111
    %v254 = vunpack.c.l.b16 %v112
    %v255 = vunpack.c.h.b16 %v112
    %v256 = vunpack.c.l.b16 %v113
    %v257 = vunpack.c.h.b16 %v113
    %v258 = vunpack.c.l.b16 %v114
    %v259 = vunpack.c.h.b16 %v114
    %v260 = vunpack.c.l.b16 %v115
    %v261 = vunpack.c.h.b16 %v115
    %v262 = vunpack.c.l.b16 %v116
    %v263 = vunpack.c.h.b16 %v116
    %v264 = vunpack.c.l.b16 %v117
    %v265 = vunpack.c.h.b16 %v117
    %v266 = vunpack.c.l.b16 %v118
    %v267 = vunpack.c.h.b16 %v118
    %v268 = vunpack.c.l.b16 %v119
    %v269 = vunpack.c.h.b16 %v119
    %v270 = vunpack.c.l.b16 %v120
    %v271 = vunpack.c.h.b16 %v120
    %v272 = vunpack.c.l.b16 %v121
    %v273 = vunpack.c.h.b16 %v121
    %v274 = vunpack.c.l.b16 %v122
    %v275 = vunpack.c.h.b16 %v122
    %v276 = vunpack.c.l.b16 %v123
    %v277 = vunpack.c.h.b16 %v123
    %v278 = vunpack.c.l.b16 %v124
    %v279 = vunpack.c.h.b16 %v124
    %v280 = vunpack.c.l.b16 %v125
    %v281 = vunpack.c.h.b16 %v125
    %v282 = vunpack.c.l.b16 %v126
    %v283 = vunpack.c.h.b16 %v126
    %v284 = vunpack.c.l.b16 %v127
    %v285 = vunpack.c.h.b16 %v127
    %v286 = vunpack.c.l.b16 %v128
    %v287 = vunpack.c.h.b16 %v128
    %v288 = vunpack.c.l.b16 %v129
    %v289 = vunpack.c.h.b16 %v129
    %v290 = vunpack.c.l.b16 %v130
    %v291 = vunpack.c.h.b16 %v130
    %v292 = vunpack.c.l.b16 %v131
    %v293 = vunpack.c.h.b16 %v131
    %v294 = vunpack.c.l.b16 %v132
    %v295 = vunpack.c.h.b16 %v132
    %v296 = vunpack.c.l.b16 %v133
    %v297 = vunpack.c.h.b16 %v133
    %v298 = vunpack.c.l.b16 %v134
    %v299 = vunpack.c.h.b16 %v134
    %v300 = vunpack.c.l.b16 %v135
    %v301 = vunpack.c.h.b16 %v135
    %v302 = vunpack.c.l.b16 %v136
    %v303 = vunpack.c.h.b16 %v136
    %v304 = vunpack.c.l.b16 %v137
    %v305 = vunpack.c.h.b16 %v137
    %v306 = vunpack.c.l.b16 %v138
    %v307 = vunpack.c.h.b16 %v138
    %v308 = vunpack.c.l.b16 %v139
    %v309 = vunpack.c.h.b16 %v139
    %v310 = vunpack.c.l.b16 %v140
    %v311 = vunpack.c.h.b16 %v140
    %v312 = vunpack.c.l.b16 %v141
    %v313 = vunpack.c.h.b16 %v141
    %v314 = vunpack.c.l.b16 %v142
    %v315 = vunpack.c.h.b16 %v142
    %v316 = vunpack.c.l.b16 %v143
    %v317 = vunpack.c.h.b16 %v143
    %v318 = vunpack.c.l.b16 %v144
    %v319 = vunpack.c.h.b16 %v144
    %v320 = vunpack.c.l.b16 %v145
    %v321 = vunpack.c.h.b16 %v145
    %v322 = vunpack.c.l.b16 %v146
    %v323 = vunpack.c.h.b16 %v146
    %v324 = vunpack.c.l.b16 %v147
    %v325 = vunpack.c.h.b16 %v147
    %v326 = vunpack.c.l.b16 %v148
    %v327 = vunpack.c.h.b16 %v148
    %v328 = vunpack.c.l.b16 %v149
    %v329 = vunpack.c.h.b16 %v149
    %v330 = vunpack.c.l.b16 %v150
    %v331 = vunpack.c.h.b16 %v150
    %v332 = vunpack.c.l.b16 %v151
    %v333 = vunpack.c.h.b16 %v151
    %v334 = vunpack.c.l.b16 %v152
    %v335 = vunpack.c.h.b16 %v152
    %v336 = vunpack.c.l.b16 %v153
    %v337 = vunpack.c.h.b16 %v153
    %v338 = vunpack.c.l.b16 %v154
    %v339 = vunpack.c.h.b16 %v154
    %v340 = vunpack.c.l.b16 %v155
    %v341 = vunpack.c.h.b16 %v155
    %v342 = vunpack.c.l.b16 %v156
    %v343 = vunpack.c.h.b16 %v156
    %v344 = vunpack.c.l.b16 %v157
    %v345 = vunpack.c.h.b16 %v157
    %v346 = vunpack.c.l.b16 %v158
    %v347 = vunpack.c.h.b16 %v158
    %v348 = vunpack.c.l.b16 %v159
    %v349 = vunpack.c.h.b16 %v159
    %v350 = vunpack.c.l.b16 %v160
    %v351 = vunpack.c.h.b16 %v160
    %v352 = vunpack.c.l.b16 %v161
    %v353 = vunpack.c.h.b16 %v161
    %v354 = vpack.c.b16 %v228, %v226
    %v355 = vpack.c.b16 %v229, %v227
    %v356 = vpack.c.b16 %v232, %v230
    %v357 = vpack.c.b16 %v233, %v231
    %v358 = vpack.c.b16 %v236, %v234
    %v359 = vpack.c.b16 %v237, %v235
    %v360 = vpack.c.b16 %v240, %v238
    %v361 = vpack.c.b16 %v241, %v239
    %v362 = vpack.c.b16 %v244, %v242
    %v363 = vpack.c.b16 %v245, %v243
    %v364 = vpack.c.b16 %v248, %v246
    %v365 = vpack.c.b16 %v249, %v247
    %v366 = vpack.c.b16 %v252, %v250
    %v367 = vpack.c.b16 %v253, %v251
    %v368 = vpack.c.b16 %v256, %v254
    %v369 = vpack.c.b16 %v257, %v255
    %v370 = vpack.c.b16 %v260, %v258
    %v371 = vpack.c.b16 %v261, %v259
    %v372 = vpack.c.b16 %v264, %v262
    %v373 = vpack.c.b16 %v265, %v263
    %v374 = vpack.c.b16 %v268, %v266
    %v375 = vpack.c.b16 %v269, %v267
    %v376 = vpack.c.b16 %v272, %v270
    %v377 = vpack.c.b16 %v273, %v271
    %v378 = vpack.c.b16 %v276, %v274
    %v379 = vpack.c.b16 %v277, %v275
    %v380 = vpack.c.b16 %v280, %v278
    %v381 = vpack.c.b16 %v281, %v279
    %v382 = vpack.c.b16 %v284, %v282
    %v383 = vpack.c.b16 %v285, %v283
    %v384 = vpack.c.b16 %v288, %v286
    %v385 = vpack.c.b16 %v289, %v287
    %v386 = vpack.c.b16 %v292, %v290
    %v387 = vpack.c.b16 %v293, %v291
    %v388 = vpack.c.b16 %v296, %v294
    %v389 = vpack.c.b16 %v297, %v295
    %v390 = vpack.c.b16 %v300, %v298
    %v391 = vpack.c.b16 %v301, %v299
    %v392 = vpack.c.b16 %v304, %v302
    %v393 = vpack.c.b16 %v305, %v303
    %v394 = vpack.c.b16 %v308, %v306
    %v395 = vpack.c.b16 %v309, %v307
    %v396 = vpack.c.b16 %v312, %v310
    %v397 = vpack.c.b16 %v313, %v311
    %v398 = vpack.c.b16 %v316, %v314
    %v399 = vpack.c.b16 %v317, %v315
    %v400 = vpack.c.b16 %v320, %v318
    %v401 = vpack.c.b16 %v321, %v319
    %v402 = vpack.c.b16 %v324, %v322
    %v403 = vpack.c.b16 %v325, %v323
    %v404 = vpack.c.b16 %v328, %v326
    %v405 = vpack.c.b16 %v329, %v327
    %v406 = vpack.c.b16 %v332, %v330
    %v407 = vpack.c.b16 %v333, %v331
    %v408 = vpack.c.b16 %v336, %v334
    %v409 = vpack.c.b16 %v337, %v335
    %v410 = vpack.c.b16 %v340, %v338
    %v411 = vpack.c.b16 %v341, %v339
    %v412 = vpack.c.b16 %v344, %v342
    %v413 = vpack.c.b16 %v345, %v343
    %v414 = vpack.c.b16 %v348, %v346
    %v415 = vpack.c.b16 %v349, %v347
    %v416 = vpack.c.b16 %v352, %v350
    %v417 = vpack.c.b16 %v353, %v351
    %482 = vmatpush.bf16.msra.mxu0 %v368
    %483 = vmatpush.bf16.msra.mxu0 %v366
    %484 = vmatpush.bf16.msra.mxu0 %v364
    %485 = vmatpush.bf16.msra.mxu0 %v362
    %486 = vmatpush.bf16.msra.mxu0 %v360
    %487 = vmatpush.bf16.msra.mxu0 %v358
    %488 = vmatpush.bf16.msra.mxu0 %v356
    %489 = vmatpush.bf16.msra.mxu0 %v354
    %490 = vmatmul.bf16.gmra.mxu0 %v94
    %v491 = vpop.f32.mrf.mxu0
    %v492 = vadd.f32 0.0, %v491
    %v493 = vpop.f32.mrf.mxu0
    %494 = vdwg.mxu0
    %495 = vmatpush.bf16.msra.mxu0 %v384
    %496 = vmatpush.bf16.msra.mxu0 %v382
    %497 = vmatpush.bf16.msra.mxu0 %v380
    %498 = vmatpush.bf16.msra.mxu0 %v378
    %499 = vmatpush.bf16.msra.mxu0 %v376
    %500 = vmatpush.bf16.msra.mxu0 %v374
    %501 = vmatpush.bf16.msra.mxu0 %v372
    %502 = vmatpush.bf16.msra.mxu0 %v370
    %503 = vmatmul.bf16.gmra.mxu0 %v95
    %v504 = vpop.f32.mrf.mxu0
    %v505 = vadd.f32 %v492, %v504
    %v506 = vpop.f32.mrf.mxu0
    %507 = vdwg.mxu0
    %508 = vmatpush.bf16.msra.mxu0 %v400
    %509 = vmatpush.bf16.msra.mxu0 %v398
    %510 = vmatpush.bf16.msra.mxu0 %v396
    %511 = vmatpush.bf16.msra.mxu0 %v394
    %512 = vmatpush.bf16.msra.mxu0 %v392
    %513 = vmatpush.bf16.msra.mxu0 %v390
    %514 = vmatpush.bf16.msra.mxu0 %v388
    %515 = vmatpush.bf16.msra.mxu0 %v386
    %516 = vmatmul.bf16.gmra.mxu0 %v96
    %v517 = vpop.f32.mrf.mxu0
    %v518 = vadd.f32 %v505, %v517
    %v519 = vpop.f32.mrf.mxu0
    %520 = vdwg.mxu0
    %521 = vmatpush.bf16.msra.mxu0 %v416
    %522 = vmatpush.bf16.msra.mxu0 %v414
    %523 = vmatpush.bf16.msra.mxu0 %v412
    %524 = vmatpush.bf16.msra.mxu0 %v410
    %525 = vmatpush.bf16.msra.mxu0 %v408
    %526 = vmatpush.bf16.msra.mxu0 %v406
    %527 = vmatpush.bf16.msra.mxu0 %v404
    %528 = vmatpush.bf16.msra.mxu0 %v402
    %529 = vmatmul.bf16.gmra.mxu0 %v97
    %v530 = vpop.f32.mrf.mxu0
    %v531 = vadd.f32 %v518, %v530
    %v532 = vpop.f32.mrf.mxu0
    %533 = vdwg.mxu0
    %534 = vmatpush.bf16.msra.mxu0 %v369
    %535 = vmatpush.bf16.msra.mxu0 %v367
    %536 = vmatpush.bf16.msra.mxu0 %v365
    %537 = vmatpush.bf16.msra.mxu0 %v363
    %538 = vmatpush.bf16.msra.mxu0 %v361
    %539 = vmatpush.bf16.msra.mxu0 %v359
    %540 = vmatpush.bf16.msra.mxu0 %v357
    %541 = vmatpush.bf16.msra.mxu0 %v355
    %542 = vmatmul.bf16.gmra.mxu0 %v94
    %v543 = vpop.f32.mrf.mxu0
    %v544 = vadd.f32 0.0, %v543
    %v545 = vpop.f32.mrf.mxu0
    %546 = vdwg.mxu0
    %547 = vmatpush.bf16.msra.mxu0 %v385
    %548 = vmatpush.bf16.msra.mxu0 %v383
    %549 = vmatpush.bf16.msra.mxu0 %v381
    %550 = vmatpush.bf16.msra.mxu0 %v379
    %551 = vmatpush.bf16.msra.mxu0 %v377
    %552 = vmatpush.bf16.msra.mxu0 %v375
    %553 = vmatpush.bf16.msra.mxu0 %v373
    %554 = vmatpush.bf16.msra.mxu0 %v371
    %555 = vmatmul.bf16.gmra.mxu0 %v95
    %v556 = vpop.f32.mrf.mxu0
    %v557 = vadd.f32 %v544, %v556
    %v558 = vpop.f32.mrf.mxu0
    %559 = vdwg.mxu0
    %560 = vmatpush.bf16.msra.mxu0 %v401
    %561 = vmatpush.bf16.msra.mxu0 %v399
    %562 = vmatpush.bf16.msra.mxu0 %v397
    %563 = vmatpush.bf16.msra.mxu0 %v395
    %564 = vmatpush.bf16.msra.mxu0 %v393
    %565 = vmatpush.bf16.msra.mxu0 %v391
    %566 = vmatpush.bf16.msra.mxu0 %v389
    %567 = vmatpush.bf16.msra.mxu0 %v387
    %568 = vmatmul.bf16.gmra.mxu0 %v96
    %v569 = vpop.f32.mrf.mxu0
    %v570 = vadd.f32 %v557, %v569
    %v571 = vpop.f32.mrf.mxu0
    %572 = vdwg.mxu0
    %573 = vmatpush.bf16.msra.mxu0 %v417
    %574 = vmatpush.bf16.msra.mxu0 %v415
    %575 = vmatpush.bf16.msra.mxu0 %v413
    %576 = vmatpush.bf16.msra.mxu0 %v411
    %577 = vmatpush.bf16.msra.mxu0 %v409
    %578 = vmatpush.bf16.msra.mxu0 %v407
    %579 = vmatpush.bf16.msra.mxu0 %v405
    %580 = vmatpush.bf16.msra.mxu0 %v403
    %581 = vmatmul.bf16.gmra.mxu0 %v97
    %v582 = vpop.f32.mrf.mxu0
    %v583 = vadd.f32 %v570, %v582
    %v584 = vpop.f32.mrf.mxu0
    %585 = vdwg.mxu0
    %v586 = vpack.c.bf16 %v531, %v531
    %v587 = vpack.c.bf16 %v583, %v583
    %v588 = vld [vmem:[#allocation7] sm:$0xff]
    %v589 = vld [vmem:[#allocation7 + $0x8] sm:$0xff]
    %v590 = vld [vmem:[#allocation7 + $0x10] sm:$0xff]
    %v591 = vld [vmem:[#allocation7 + $0x18] sm:$0xff]
    %v592 = vld [vmem:[#allocation7 + $0x20] sm:$0xff]
    %v593 = vld [vmem:[#allocation7 + $0x28] sm:$0xff]
    %v594 = vld [vmem:[#allocation7 + $0x30] sm:$0xff]
    %v595 = vld [vmem:[#allocation7 + $0x38] sm:$0xff]
    %v596 = vld [vmem:[#allocation7 + $0x40] sm:$0xff]
    %v597 = vld [vmem:[#allocation7 + $0x48] sm:$0xff]
    %v598 = vld [vmem:[#allocation7 + $0x50] sm:$0xff]
    %v599 = vld [vmem:[#allocation7 + $0x58] sm:$0xff]
    %v600 = vld [vmem:[#allocation7 + $0x60] sm:$0xff]
    %v601 = vld [vmem:[#allocation7 + $0x68] sm:$0xff]
    %v602 = vld [vmem:[#allocation7 + $0x70] sm:$0xff]
    %v603 = vld [vmem:[#allocation7 + $0x78] sm:$0xff]
    %v604 = vld [vmem:[#allocation7 + $0x80] sm:$0xff]
    %v605 = vld [vmem:[#allocation7 + $0x88] sm:$0xff]
    %v606 = vld [vmem:[#allocation7 + $0x90] sm:$0xff]
    %v607 = vld [vmem:[#allocation7 + $0x98] sm:$0xff]
    %v608 = vld [vmem:[#allocation7 + $0xa0] sm:$0xff]
    %v609 = vld [vmem:[#allocation7 + $0xa8] sm:$0xff]
    %v610 = vld [vmem:[#allocation7 + $0xb0] sm:$0xff]
    %v611 = vld [vmem:[#allocation7 + $0xb8] sm:$0xff]
    %v612 = vld [vmem:[#allocation7 + $0xc0] sm:$0xff]
    %v613 = vld [vmem:[#allocation7 + $0xc8] sm:$0xff]
    %v614 = vld [vmem:[#allocation7 + $0xd0] sm:$0xff]
    %v615 = vld [vmem:[#allocation7 + $0xd8] sm:$0xff]
    %v616 = vld [vmem:[#allocation7 + $0xe0] sm:$0xff]
    %v617 = vld [vmem:[#allocation7 + $0xe8] sm:$0xff]
    %v618 = vld [vmem:[#allocation7 + $0xf0] sm:$0xff]
    %v619 = vld [vmem:[#allocation7 + $0xf8] sm:$0xff]
    %v652 = vunpack.c.l.b16 %v588
    %v653 = vunpack.c.h.b16 %v588
    %v654 = vunpack.c.l.b16 %v589
    %v655 = vunpack.c.h.b16 %v589
    %v656 = vunpack.c.l.b16 %v590
    %v657 = vunpack.c.h.b16 %v590
    %v658 = vunpack.c.l.b16 %v591
    %v659 = vunpack.c.h.b16 %v591
    %v660 = vunpack.c.l.b16 %v592
    %v661 = vunpack.c.h.b16 %v592
    %v662 = vunpack.c.l.b16 %v593
    %v663 = vunpack.c.h.b16 %v593
    %v664 = vunpack.c.l.b16 %v594
    %v665 = vunpack.c.h.b16 %v594
    %v666 = vunpack.c.l.b16 %v595
    %v667 = vunpack.c.h.b16 %v595
    %v668 = vunpack.c.l.b16 %v596
    %v669 = vunpack.c.h.b16 %v596
    %v670 = vunpack.c.l.b16 %v597
    %v671 = vunpack.c.h.b16 %v597
    %v672 = vunpack.c.l.b16 %v598
    %v673 = vunpack.c.h.b16 %v598
    %v674 = vunpack.c.l.b16 %v599
    %v675 = vunpack.c.h.b16 %v599
    %v676 = vunpack.c.l.b16 %v600
    %v677 = vunpack.c.h.b16 %v600
    %v678 = vunpack.c.l.b16 %v601
    %v679 = vunpack.c.h.b16 %v601
    %v680 = vunpack.c.l.b16 %v602
    %v681 = vunpack.c.h.b16 %v602
    %v682 = vunpack.c.l.b16 %v603
    %v683 = vunpack.c.h.b16 %v603
    %v684 = vunpack.c.l.b16 %v604
    %v685 = vunpack.c.h.b16 %v604
    %v686 = vunpack.c.l.b16 %v605
    %v687 = vunpack.c.h.b16 %v605
    %v688 = vunpack.c.l.b16 %v606
    %v689 = vunpack.c.h.b16 %v606
    %v690 = vunpack.c.l.b16 %v607
    %v691 = vunpack.c.h.b16 %v607
    %v692 = vunpack.c.l.b16 %v608
    %v693 = vunpack.c.h.b16 %v608
    %v694 = vunpack.c.l.b16 %v609
    %v695 = vunpack.c.h.b16 %v609
    %v696 = vunpack.c.l.b16 %v610
    %v697 = vunpack.c.h.b16 %v610
    %v698 = vunpack.c.l.b16 %v611
    %v699 = vunpack.c.h.b16 %v611
    %v700 = vunpack.c.l.b16 %v612
    %v701 = vunpack.c.h.b16 %v612
    %v702 = vunpack.c.l.b16 %v613
    %v703 = vunpack.c.h.b16 %v613
    %v704 = vunpack.c.l.b16 %v614
    %v705 = vunpack.c.h.b16 %v614
    %v706 = vunpack.c.l.b16 %v615
    %v707 = vunpack.c.h.b16 %v615
    %v708 = vunpack.c.l.b16 %v616
    %v709 = vunpack.c.h.b16 %v616
    %v710 = vunpack.c.l.b16 %v617
    %v711 = vunpack.c.h.b16 %v617
    %v712 = vunpack.c.l.b16 %v618
    %v713 = vunpack.c.h.b16 %v618
    %v714 = vunpack.c.l.b16 %v619
    %v715 = vunpack.c.h.b16 %v619
    %v716 = vpack.c.b16 %v654, %v652
    %v717 = vpack.c.b16 %v655, %v653
    %v718 = vpack.c.b16 %v658, %v656
    %v719 = vpack.c.b16 %v659, %v657
    %v720 = vpack.c.b16 %v662, %v660
    %v721 = vpack.c.b16 %v663, %v661
    %v722 = vpack.c.b16 %v666, %v664
    %v723 = vpack.c.b16 %v667, %v665
    %v724 = vpack.c.b16 %v670, %v668
    %v725 = vpack.c.b16 %v671, %v669
    %v726 = vpack.c.b16 %v674, %v672
    %v727 = vpack.c.b16 %v675, %v673
    %v728 = vpack.c.b16 %v678, %v676
    %v729 = vpack.c.b16 %v679, %v677
    %v730 = vpack.c.b16 %v682, %v680
    %v731 = vpack.c.b16 %v683, %v681
    %v732 = vpack.c.b16 %v686, %v684
    %v733 = vpack.c.b16 %v687, %v685
    %v734 = vpack.c.b16 %v690, %v688
    %v735 = vpack.c.b16 %v691, %v689
    %v736 = vpack.c.b16 %v694, %v692
    %v737 = vpack.c.b16 %v695, %v693
    %v738 = vpack.c.b16 %v698, %v696
    %v739 = vpack.c.b16 %v699, %v697
    %v740 = vpack.c.b16 %v702, %v700
    %v741 = vpack.c.b16 %v703, %v701
    %v742 = vpack.c.b16 %v706, %v704
    %v743 = vpack.c.b16 %v707, %v705
    %v744 = vpack.c.b16 %v710, %v708
    %v745 = vpack.c.b16 %v711, %v709
    %v746 = vpack.c.b16 %v714, %v712
    %v747 = vpack.c.b16 %v715, %v713
    %780 = vmatpush.bf16.msra.mxu0 %v730
    %781 = vmatpush.bf16.msra.mxu0 %v728
    %782 = vmatpush.bf16.msra.mxu0 %v726
    %783 = vmatpush.bf16.msra.mxu0 %v724
    %784 = vmatpush.bf16.msra.mxu0 %v722
    %785 = vmatpush.bf16.msra.mxu0 %v720
    %786 = vmatpush.bf16.msra.mxu0 %v718
    %787 = vmatpush.bf16.msra.mxu0 %v716
    %788 = vmatmul.bf16.gmra.mxu0 %v586
    %v789 = vpop.f32.mrf.mxu0
    %v790 = vadd.f32 0.0, %v789
    %v791 = vpop.f32.mrf.mxu0
    %792 = vdwg.mxu0
    %793 = vmatpush.bf16.msra.mxu0 %v746
    %794 = vmatpush.bf16.msra.mxu0 %v744
    %795 = vmatpush.bf16.msra.mxu0 %v742
    %796 = vmatpush.bf16.msra.mxu0 %v740
    %797 = vmatpush.bf16.msra.mxu0 %v738
    %798 = vmatpush.bf16.msra.mxu0 %v736
    %799 = vmatpush.bf16.msra.mxu0 %v734
    %800 = vmatpush.bf16.msra.mxu0 %v732
    %801 = vmatmul.bf16.gmra.mxu0 %v587
    %v802 = vpop.f32.mrf.mxu0
    %v803 = vadd.f32 %v790, %v802
    %v804 = vpop.f32.mrf.mxu0
    %805 = vdwg.mxu0
    %806 = vmatpush.bf16.msra.mxu0 %v731
    %807 = vmatpush.bf16.msra.mxu0 %v729
    %808 = vmatpush.bf16.msra.mxu0 %v727
    %809 = vmatpush.bf16.msra.mxu0 %v725
    %810 = vmatpush.bf16.msra.mxu0 %v723
    %811 = vmatpush.bf16.msra.mxu0 %v721
    %812 = vmatpush.bf16.msra.mxu0 %v719
    %813 = vmatpush.bf16.msra.mxu0 %v717
    %814 = vmatmul.bf16.gmra.mxu0 %v586
    %v815 = vpop.f32.mrf.mxu0
    %v816 = vadd.f32 0.0, %v815
    %v817 = vpop.f32.mrf.mxu0
    %818 = vdwg.mxu0
    %819 = vmatpush.bf16.msra.mxu0 %v747
    %820 = vmatpush.bf16.msra.mxu0 %v745
    %821 = vmatpush.bf16.msra.mxu0 %v743
    %822 = vmatpush.bf16.msra.mxu0 %v741
    %823 = vmatpush.bf16.msra.mxu0 %v739
    %824 = vmatpush.bf16.msra.mxu0 %v737
    %825 = vmatpush.bf16.msra.mxu0 %v735
    %826 = vmatpush.bf16.msra.mxu0 %v733
    %827 = vmatmul.bf16.gmra.mxu0 %v587
    %v828 = vpop.f32.mrf.mxu0
    %v829 = vadd.f32 %v816, %v828
    %v830 = vpop.f32.mrf.mxu0
    %831 = vdwg.mxu0
    %v832 = vpack.c.bf16 %v803, %v803
    %v833 = vpack.c.bf16 %v829, %v829
    %v834 = vld [vmem:[#allocation8] sm:$0xff]
    %v835 = vld [vmem:[#allocation8 + $0x8] sm:$0xff]
    %v836 = vld [vmem:[#allocation8 + $0x10] sm:$0xff]
    %v837 = vld [vmem:[#allocation8 + $0x18] sm:$0xff]
    %v838 = vld [vmem:[#allocation8 + $0x20] sm:$0xff]
    %v839 = vld [vmem:[#allocation8 + $0x28] sm:$0xff]
    %v840 = vld [vmem:[#allocation8 + $0x30] sm:$0xff]
    %v841 = vld [vmem:[#allocation8 + $0x38] sm:$0xff]
    %v842 = vld [vmem:[#allocation8 + $0x40] sm:$0xff]
    %v843 = vld [vmem:[#allocation8 + $0x48] sm:$0xff]
    %v844 = vld [vmem:[#allocation8 + $0x50] sm:$0xff]
    %v845 = vld [vmem:[#allocation8 + $0x58] sm:$0xff]
    %v846 = vld [vmem:[#allocation8 + $0x60] sm:$0xff]
    %v847 = vld [vmem:[#allocation8 + $0x68] sm:$0xff]
    %v848 = vld [vmem:[#allocation8 + $0x70] sm:$0xff]
    %v849 = vld [vmem:[#allocation8 + $0x78] sm:$0xff]
    %v850 = vld [vmem:[#allocation8 + $0x80] sm:$0xff]
    %v851 = vld [vmem:[#allocation8 + $0x88] sm:$0xff]
    %v852 = vld [vmem:[#allocation8 + $0x90] sm:$0xff]
    %v853 = vld [vmem:[#allocation8 + $0x98] sm:$0xff]
    %v854 = vld [vmem:[#allocation8 + $0xa0] sm:$0xff]
    %v855 = vld [vmem:[#allocation8 + $0xa8] sm:$0xff]
    %v856 = vld [vmem:[#allocation8 + $0xb0] sm:$0xff]
    %v857 = vld [vmem:[#allocation8 + $0xb8] sm:$0xff]
    %v858 = vld [vmem:[#allocation8 + $0xc0] sm:$0xff]
    %v859 = vld [vmem:[#allocation8 + $0xc8] sm:$0xff]
    %v860 = vld [vmem:[#allocation8 + $0xd0] sm:$0xff]
    %v861 = vld [vmem:[#allocation8 + $0xd8] sm:$0xff]
    %v862 = vld [vmem:[#allocation8 + $0xe0] sm:$0xff]
    %v863 = vld [vmem:[#allocation8 + $0xe8] sm:$0xff]
    %v864 = vld [vmem:[#allocation8 + $0xf0] sm:$0xff]
    %v865 = vld [vmem:[#allocation8 + $0xf8] sm:$0xff]
    %v866 = vld [vmem:[#allocation8 + $0x100] sm:$0xff]
    %v867 = vld [vmem:[#allocation8 + $0x108] sm:$0xff]
    %v868 = vld [vmem:[#allocation8 + $0x110] sm:$0xff]
    %v869 = vld [vmem:[#allocation8 + $0x118] sm:$0xff]
    %v870 = vld [vmem:[#allocation8 + $0x120] sm:$0xff]
    %v871 = vld [vmem:[#allocation8 + $0x128] sm:$0xff]
    %v872 = vld [vmem:[#allocation8 + $0x130] sm:$0xff]
    %v873 = vld [vmem:[#allocation8 + $0x138] sm:$0xff]
    %v874 = vld [vmem:[#allocation8 + $0x140] sm:$0xff]
    %v875 = vld [vmem:[#allocation8 + $0x148] sm:$0xff]
    %v876 = vld [vmem:[#allocation8 + $0x150] sm:$0xff]
    %v877 = vld [vmem:[#allocation8 + $0x158] sm:$0xff]
    %v878 = vld [vmem:[#allocation8 + $0x160] sm:$0xff]
    %v879 = vld [vmem:[#allocation8 + $0x168] sm:$0xff]
    %v880 = vld [vmem:[#allocation8 + $0x170] sm:$0xff]
    %v881 = vld [vmem:[#allocation8 + $0x178] sm:$0xff]
    %v882 = vld [vmem:[#allocation8 + $0x180] sm:$0xff]
    %v883 = vld [vmem:[#allocation8 + $0x188] sm:$0xff]
    %v884 = vld [vmem:[#allocation8 + $0x190] sm:$0xff]
    %v885 = vld [vmem:[#allocation8 + $0x198] sm:$0xff]
    %v886 = vld [vmem:[#allocation8 + $0x1a0] sm:$0xff]
    %v887 = vld [vmem:[#allocation8 + $0x1a8] sm:$0xff]
    %v888 = vld [vmem:[#allocation8 + $0x1b0] sm:$0xff]
    %v889 = vld [vmem:[#allocation8 + $0x1b8] sm:$0xff]
    %v890 = vld [vmem:[#allocation8 + $0x1c0] sm:$0xff]
    %v891 = vld [vmem:[#allocation8 + $0x1c8] sm:$0xff]
    %v892 = vld [vmem:[#allocation8 + $0x1d0] sm:$0xff]
    %v893 = vld [vmem:[#allocation8 + $0x1d8] sm:$0xff]
    %v894 = vld [vmem:[#allocation8 + $0x1e0] sm:$0xff]
    %v895 = vld [vmem:[#allocation8 + $0x1e8] sm:$0xff]
    %v896 = vld [vmem:[#allocation8 + $0x1f0] sm:$0xff]
    %v897 = vld [vmem:[#allocation8 + $0x1f8] sm:$0xff]
    %v962 = vunpack.c.l.b16 %v834
    %v963 = vunpack.c.h.b16 %v834
    %v964 = vunpack.c.l.b16 %v835
    %v965 = vunpack.c.h.b16 %v835
    %v966 = vunpack.c.l.b16 %v836
    %v967 = vunpack.c.h.b16 %v836
    %v968 = vunpack.c.l.b16 %v837
    %v969 = vunpack.c.h.b16 %v837
    %v970 = vunpack.c.l.b16 %v838
    %v971 = vunpack.c.h.b16 %v838
    %v972 = vunpack.c.l.b16 %v839
    %v973 = vunpack.c.h.b16 %v839
    %v974 = vunpack.c.l.b16 %v840
    %v975 = vunpack.c.h.b16 %v840
    %v976 = vunpack.c.l.b16 %v841
    %v977 = vunpack.c.h.b16 %v841
    %v978 = vunpack.c.l.b16 %v842
    %v979 = vunpack.c.h.b16 %v842
    %v980 = vunpack.c.l.b16 %v843
    %v981 = vunpack.c.h.b16 %v843
    %v982 = vunpack.c.l.b16 %v844
    %v983 = vunpack.c.h.b16 %v844
    %v984 = vunpack.c.l.b16 %v845
    %v985 = vunpack.c.h.b16 %v845
    %v986 = vunpack.c.l.b16 %v846
    %v987 = vunpack.c.h.b16 %v846
    %v988 = vunpack.c.l.b16 %v847
    %v989 = vunpack.c.h.b16 %v847
    %v990 = vunpack.c.l.b16 %v848
    %v991 = vunpack.c.h.b16 %v848
    %v992 = vunpack.c.l.b16 %v849
    %v993 = vunpack.c.h.b16 %v849
    %v994 = vunpack.c.l.b16 %v850
    %v995 = vunpack.c.h.b16 %v850
    %v996 = vunpack.c.l.b16 %v851
    %v997 = vunpack.c.h.b16 %v851
    %v998 = vunpack.c.l.b16 %v852
    %v999 = vunpack.c.h.b16 %v852
    %v1000 = vunpack.c.l.b16 %v853
    %v1001 = vunpack.c.h.b16 %v853
    %v1002 = vunpack.c.l.b16 %v854
    %v1003 = vunpack.c.h.b16 %v854
    %v1004 = vunpack.c.l.b16 %v855
    %v1005 = vunpack.c.h.b16 %v855
    %v1006 = vunpack.c.l.b16 %v856
    %v1007 = vunpack.c.h.b16 %v856
    %v1008 = vunpack.c.l.b16 %v857
    %v1009 = vunpack.c.h.b16 %v857
    %v1010 = vunpack.c.l.b16 %v858
    %v1011 = vunpack.c.h.b16 %v858
    %v1012 = vunpack.c.l.b16 %v859
    %v1013 = vunpack.c.h.b16 %v859
    %v1014 = vunpack.c.l.b16 %v860
    %v1015 = vunpack.c.h.b16 %v860
    %v1016 = vunpack.c.l.b16 %v861
    %v1017 = vunpack.c.h.b16 %v861
    %v1018 = vunpack.c.l.b16 %v862
    %v1019 = vunpack.c.h.b16 %v862
    %v1020 = vunpack.c.l.b16 %v863
    %v1021 = vunpack.c.h.b16 %v863
    %v1022 = vunpack.c.l.b16 %v864
    %v1023 = vunpack.c.h.b16 %v864
    %v1024 = vunpack.c.l.b16 %v865
    %v1025 = vunpack.c.h.b16 %v865
    %v1026 = vunpack.c.l.b16 %v866
    %v1027 = vunpack.c.h.b16 %v866
    %v1028 = vunpack.c.l.b16 %v867
    %v1029 = vunpack.c.h.b16 %v867
    %v1030 = vunpack.c.l.b16 %v868
    %v1031 = vunpack.c.h.b16 %v868
    %v1032 = vunpack.c.l.b16 %v869
    %v1033 = vunpack.c.h.b16 %v869
    %v1034 = vunpack.c.l.b16 %v870
    %v1035 = vunpack.c.h.b16 %v870
    %v1036 = vunpack.c.l.b16 %v871
    %v1037 = vunpack.c.h.b16 %v871
    %v1038 = vunpack.c.l.b16 %v872
    %v1039 = vunpack.c.h.b16 %v872
    %v1040 = vunpack.c.l.b16 %v873
    %v1041 = vunpack.c.h.b16 %v873
    %v1042 = vunpack.c.l.b16 %v874
    %v1043 = vunpack.c.h.b16 %v874
    %v1044 = vunpack.c.l.b16 %v875
    %v1045 = vunpack.c.h.b16 %v875
    %v1046 = vunpack.c.l.b16 %v876
    %v1047 = vunpack.c.h.b16 %v876
    %v1048 = vunpack.c.l.b16 %v877
    %v1049 = vunpack.c.h.b16 %v877
    %v1050 = vunpack.c.l.b16 %v878
    %v1051 = vunpack.c.h.b16 %v878
    %v1052 = vunpack.c.l.b16 %v879
    %v1053 = vunpack.c.h.b16 %v879
    %v1054 = vunpack.c.l.b16 %v880
    %v1055 = vunpack.c.h.b16 %v880
    %v1056 = vunpack.c.l.b16 %v881
    %v1057 = vunpack.c.h.b16 %v881
    %v1058 = vunpack.c.l.b16 %v882
    %v1059 = vunpack.c.h.b16 %v882
    %v1060 = vunpack.c.l.b16 %v883
    %v1061 = vunpack.c.h.b16 %v883
    %v1062 = vunpack.c.l.b16 %v884
    %v1063 = vunpack.c.h.b16 %v884
    %v1064 = vunpack.c.l.b16 %v885
    %v1065 = vunpack.c.h.b16 %v885
    %v1066 = vunpack.c.l.b16 %v886
    %v1067 = vunpack.c.h.b16 %v886
    %v1068 = vunpack.c.l.b16 %v887
    %v1069 = vunpack.c.h.b16 %v887
    %v1070 = vunpack.c.l.b16 %v888
    %v1071 = vunpack.c.h.b16 %v888
    %v1072 = vunpack.c.l.b16 %v889
    %v1073 = vunpack.c.h.b16 %v889
    %v1074 = vunpack.c.l.b16 %v890
    %v1075 = vunpack.c.h.b16 %v890
    %v1076 = vunpack.c.l.b16 %v891
    %v1077 = vunpack.c.h.b16 %v891
    %v1078 = vunpack.c.l.b16 %v892
    %v1079 = vunpack.c.h.b16 %v892
    %v1080 = vunpack.c.l.b16 %v893
    %v1081 = vunpack.c.h.b16 %v893
    %v1082 = vunpack.c.l.b16 %v894
    %v1083 = vunpack.c.h.b16 %v894
    %v1084 = vunpack.c.l.b16 %v895
    %v1085 = vunpack.c.h.b16 %v895
    %v1086 = vunpack.c.l.b16 %v896
    %v1087 = vunpack.c.h.b16 %v896
    %v1088 = vunpack.c.l.b16 %v897
    %v1089 = vunpack.c.h.b16 %v897
    %v1090 = vpack.c.b16 %v966, %v962
    %v1091 = vpack.c.b16 %v967, %v963
    %v1092 = vpack.c.b16 %v968, %v964
    %v1093 = vpack.c.b16 %v969, %v965
    %v1094 = vpack.c.b16 %v974, %v970
    %v1095 = vpack.c.b16 %v975, %v971
    %v1096 = vpack.c.b16 %v976, %v972
    %v1097 = vpack.c.b16 %v977, %v973
    %v1098 = vpack.c.b16 %v982, %v978
    %v1099 = vpack.c.b16 %v983, %v979
    %v1100 = vpack.c.b16 %v984, %v980
    %v1101 = vpack.c.b16 %v985, %v981
    %v1102 = vpack.c.b16 %v990, %v986
    %v1103 = vpack.c.b16 %v991, %v987
    %v1104 = vpack.c.b16 %v992, %v988
    %v1105 = vpack.c.b16 %v993, %v989
    %v1106 = vpack.c.b16 %v998, %v994
    %v1107 = vpack.c.b16 %v999, %v995
    %v1108 = vpack.c.b16 %v1000, %v996
    %v1109 = vpack.c.b16 %v1001, %v997
    %v1110 = vpack.c.b16 %v1006, %v1002
    %v1111 = vpack.c.b16 %v1007, %v1003
    %v1112 = vpack.c.b16 %v1008, %v1004
    %v1113 = vpack.c.b16 %v1009, %v1005
    %v1114 = vpack.c.b16 %v1014, %v1010
    %v1115 = vpack.c.b16 %v1015, %v1011
    %v1116 = vpack.c.b16 %v1016, %v1012
    %v1117 = vpack.c.b16 %v1017, %v1013
    %v1118 = vpack.c.b16 %v1022, %v1018
    %v1119 = vpack.c.b16 %v1023, %v1019
    %v1120 = vpack.c.b16 %v1024, %v1020
    %v1121 = vpack.c.b16 %v1025, %v1021
    %v1122 = vpack.c.b16 %v1030, %v1026
    %v1123 = vpack.c.b16 %v1031, %v1027
    %v1124 = vpack.c.b16 %v1032, %v1028
    %v1125 = vpack.c.b16 %v1033, %v1029
    %v1126 = vpack.c.b16 %v1038, %v1034
    %v1127 = vpack.c.b16 %v1039, %v1035
    %v1128 = vpack.c.b16 %v1040, %v1036
    %v1129 = vpack.c.b16 %v1041, %v1037
    %v1130 = vpack.c.b16 %v1046, %v1042
    %v1131 = vpack.c.b16 %v1047, %v1043
    %v1132 = vpack.c.b16 %v1048, %v1044
    %v1133 = vpack.c.b16 %v1049, %v1045
    %v1134 = vpack.c.b16 %v1054, %v1050
    %v1135 = vpack.c.b16 %v1055, %v1051
    %v1136 = vpack.c.b16 %v1056, %v1052
    %v1137 = vpack.c.b16 %v1057, %v1053
    %v1138 = vpack.c.b16 %v1062, %v1058
    %v1139 = vpack.c.b16 %v1063, %v1059
    %v1140 = vpack.c.b16 %v1064, %v1060
    %v1141 = vpack.c.b16 %v1065, %v1061
    %v1142 = vpack.c.b16 %v1070, %v1066
    %v1143 = vpack.c.b16 %v1071, %v1067
    %v1144 = vpack.c.b16 %v1072, %v1068
    %v1145 = vpack.c.b16 %v1073, %v1069
    %v1146 = vpack.c.b16 %v1078, %v1074
    %v1147 = vpack.c.b16 %v1079, %v1075
    %v1148 = vpack.c.b16 %v1080, %v1076
    %v1149 = vpack.c.b16 %v1081, %v1077
    %v1150 = vpack.c.b16 %v1086, %v1082
    %v1151 = vpack.c.b16 %v1087, %v1083
    %v1152 = vpack.c.b16 %v1088, %v1084
    %v1153 = vpack.c.b16 %v1089, %v1085
    %1218 = vmatpush.bf16.msra.mxu0 %v1118
    %1219 = vmatpush.bf16.msra.mxu0 %v1114
    %1220 = vmatpush.bf16.msra.mxu0 %v1110
    %1221 = vmatpush.bf16.msra.mxu0 %v1106
    %1222 = vmatpush.bf16.msra.mxu0 %v1102
    %1223 = vmatpush.bf16.msra.mxu0 %v1098
    %1224 = vmatpush.bf16.msra.mxu0 %v1094
    %1225 = vmatpush.bf16.msra.mxu0 %v1090
    %1226 = vmatmul.bf16.gmra.mxu0 %v832
    %v1227 = vpop.f32.mrf.mxu0
    %v1228 = vadd.f32 0.0, %v1227
    %v1229 = vpop.f32.mrf.mxu0
    %1230 = vdwg.mxu0
    %1231 = vmatpush.bf16.msra.mxu0 %v1150
    %1232 = vmatpush.bf16.msra.mxu0 %v1146
    %1233 = vmatpush.bf16.msra.mxu0 %v1142
    %1234 = vmatpush.bf16.msra.mxu0 %v1138
    %1235 = vmatpush.bf16.msra.mxu0 %v1134
    %1236 = vmatpush.bf16.msra.mxu0 %v1130
    %1237 = vmatpush.bf16.msra.mxu0 %v1126
    %1238 = vmatpush.bf16.msra.mxu0 %v1122
    %1239 = vmatmul.bf16.gmra.mxu0 %v833
    %v1240 = vpop.f32.mrf.mxu0
    %v1241 = vadd.f32 %v1228, %v1240
    %v1242 = vpop.f32.mrf.mxu0
    %1243 = vdwg.mxu0
    %1244 = vmatpush.bf16.msra.mxu0 %v1119
    %1245 = vmatpush.bf16.msra.mxu0 %v1115
    %1246 = vmatpush.bf16.msra.mxu0 %v1111
    %1247 = vmatpush.bf16.msra.mxu0 %v1107
    %1248 = vmatpush.bf16.msra.mxu0 %v1103
    %1249 = vmatpush.bf16.msra.mxu0 %v1099
    %1250 = vmatpush.bf16.msra.mxu0 %v1095
    %1251 = vmatpush.bf16.msra.mxu0 %v1091
    %1252 = vmatmul.bf16.gmra.mxu0 %v832
    %v1253 = vpop.f32.mrf.mxu0
    %v1254 = vadd.f32 0.0, %v1253
    %v1255 = vpop.f32.mrf.mxu0
    %1256 = vdwg.mxu0
    %1257 = vmatpush.bf16.msra.mxu0 %v1151
    %1258 = vmatpush.bf16.msra.mxu0 %v1147
    %1259 = vmatpush.bf16.msra.mxu0 %v1143
    %1260 = vmatpush.bf16.msra.mxu0 %v1139
    %1261 = vmatpush.bf16.msra.mxu0 %v1135
    %1262 = vmatpush.bf16.msra.mxu0 %v1131
    %1263 = vmatpush.bf16.msra.mxu0 %v1127
    %1264 = vmatpush.bf16.msra.mxu0 %v1123
    %1265 = vmatmul.bf16.gmra.mxu0 %v833
    %v1266 = vpop.f32.mrf.mxu0
    %v1267 = vadd.f32 %v1254, %v1266
    %v1268 = vpop.f32.mrf.mxu0
    %1269 = vdwg.mxu0
    %1270 = vmatpush.bf16.msra.mxu0 %v1120
    %1271 = vmatpush.bf16.msra.mxu0 %v1116
    %1272 = vmatpush.bf16.msra.mxu0 %v1112
    %1273 = vmatpush.bf16.msra.mxu0 %v1108
    %1274 = vmatpush.bf16.msra.mxu0 %v1104
    %1275 = vmatpush.bf16.msra.mxu0 %v1100
    %1276 = vmatpush.bf16.msra.mxu0 %v1096
    %1277 = vmatpush.bf16.msra.mxu0 %v1092
    %1278 = vmatmul.bf16.gmra.mxu0 %v832
    %v1279 = vpop.f32.mrf.mxu0
    %v1280 = vadd.f32 0.0, %v1279
    %v1281 = vpop.f32.mrf.mxu0
    %1282 = vdwg.mxu0
    %1283 = vmatpush.bf16.msra.mxu0 %v1152
    %1284 = vmatpush.bf16.msra.mxu0 %v1148
    %1285 = vmatpush.bf16.msra.mxu0 %v1144
    %1286 = vmatpush.bf16.msra.mxu0 %v1140
    %1287 = vmatpush.bf16.msra.mxu0 %v1136
    %1288 = vmatpush.bf16.msra.mxu0 %v1132
    %1289 = vmatpush.bf16.msra.mxu0 %v1128
    %1290 = vmatpush.bf16.msra.mxu0 %v1124
    %1291 = vmatmul.bf16.gmra.mxu0 %v833
    %v1292 = vpop.f32.mrf.mxu0
    %v1293 = vadd.f32 %v1280, %v1292
    %v1294 = vpop.f32.mrf.mxu0
    %1295 = vdwg.mxu0
    %1296 = vmatpush.bf16.msra.mxu0 %v1121
    %1297 = vmatpush.bf16.msra.mxu0 %v1117
    %1298 = vmatpush.bf16.msra.mxu0 %v1113
    %1299 = vmatpush.bf16.msra.mxu0 %v1109
    %1300 = vmatpush.bf16.msra.mxu0 %v1105
    %1301 = vmatpush.bf16.msra.mxu0 %v1101
    %1302 = vmatpush.bf16.msra.mxu0 %v1097
    %1303 = vmatpush.bf16.msra.mxu0 %v1093
    %1304 = vmatmul.bf16.gmra.mxu0 %v832
    %v1305 = vpop.f32.mrf.mxu0
    %v1306 = vadd.f32 0.0, %v1305
    %v1307 = vpop.f32.mrf.mxu0
    %1308 = vdwg.mxu0
    %1309 = vmatpush.bf16.msra.mxu0 %v1153
    %1310 = vmatpush.bf16.msra.mxu0 %v1149
    %1311 = vmatpush.bf16.msra.mxu0 %v1145
    %1312 = vmatpush.bf16.msra.mxu0 %v1141
    %1313 = vmatpush.bf16.msra.mxu0 %v1137
    %1314 = vmatpush.bf16.msra.mxu0 %v1133
    %1315 = vmatpush.bf16.msra.mxu0 %v1129
    %1316 = vmatpush.bf16.msra.mxu0 %v1125
    %1317 = vmatmul.bf16.gmra.mxu0 %v833
    %v1318 = vpop.f32.mrf.mxu0
    %v1319 = vadd.f32 %v1306, %v1318
    %v1320 = vpop.f32.mrf.mxu0
    %1321 = vdwg.mxu0
    %v1326 = vrot.slane %v1267, 4
    %v1327 = vrot.slane %v1319, 4
    %vm1328 = vcmask 1043456
    %v1329 = vsel %vm1328, %v1241, %v1326
    %v1330 = vsel %vm1328, %v1293, %v1327
    %1333 = vst [vmem:[#allocation10] sm:$0xff] %v1329
    %1334 = vst [vmem:[#allocation10 + $0x8] sm:$0xff] %v1330
    // Predicated region
    $region34: #{tpu_custom_call.1} parent=1 // pred_check
      _
    $region35: #{tpu_custom_call.1} parent=1 // pred_check_branch
      %1336 = sbr.rel (0) target = $region37
    $region36: #{tpu_custom_call.1} parent=1 // pred_region
      %1338 = vsyncadd [#allocation4], 0
      %s1340 = sshll.u32 [#allocation10], 4
      %s1341 = int_to_ptr.vmem [resolvable:$true] %s1340
      %s1342 = sshll.u32 %s4, 4
      %s1343 = int_to_ptr.hbm [resolvable:$true] %s1342
      %1345 = dma.vmem_to_hbm [thread:$0]  %s1341, 256, %s1343, [#allocation4]
    $region37: #{tpu_custom_call.1} parent=1 // pred_fallthru
      _
    // Predicated region
    $region38: #{tpu_custom_call.1} parent=1 // pred_check
      _
    $region39: #{tpu_custom_call.1} parent=1 // pred_check_branch
      %1347 = sbr.rel (0) target = $region41
    $region40: #{tpu_custom_call.1} parent=1 // pred_region
      %1349 = dma.done [#allocation4], 256
    $region41: #{tpu_custom_call.1} parent=1 // pred_fallthru
      _
    %1350 = vsyncpa [#allocation3], 1
    %1351 = vsyncpa [#allocation6], 1
    %1352 = vsyncpa [#allocation9], 1
    %1353 = vsyncpa [#allocation4], 1

</llo_original>
